<compile_context>
chip_gen: v7x
topology: tpu7x:2x2x1
jax: 0.10.0
libtpu: 0.0.40
codegen_flags: <defaults>
</compile_context>

<pallas_src>
import jax
import jax.numpy as jnp
from jax import lax
from jax.experimental import pallas as pl
from jax.experimental.pallas import tpu as pltpu

_MIB = 1024 * 1024
LANE_CANDIDATES = (512, 256, 128)     # lane-dense widths (multiples of 128)

_HW_CACHE = None


# ---------------------------------------------------------------------------
# Hardware-aware sizing
# ---------------------------------------------------------------------------
def _hw_params():
    """Generation-aware VMEM limit, per-stream block target and megacore split."""
    global _HW_CACHE
    if _HW_CACHE is not None:
        return _HW_CACHE
    vmem_cap = None
    try:
        info = pltpu.get_tpu_info()
        cap = int(getattr(info, "vmem_capacity_bytes", 0) or 0)
        vmem_cap = cap if cap > 0 else None
    except Exception:
        vmem_cap = None

    if vmem_cap is None:
        # Unknown hardware: conservative settings legal on every TPU generation.
        _HW_CACHE = {"vmem_limit": 40 * _MIB, "block_target": 4 * _MIB, "npar": 1}
    elif vmem_cap <= 64 * _MIB:
        # v7x-class: 64 MiB VMEM per TensorCore, 2 TensorCores per chip.
        _HW_CACHE = {"vmem_limit": min(40 * _MIB, int(0.7 * vmem_cap)),
                     "block_target": 4 * _MIB, "npar": 2}
    else:
        # v5e/v6e-class: 128 MiB VMEM, single TensorCore.
        _HW_CACHE = {"vmem_limit": min(96 * _MIB, int(0.75 * vmem_cap)),
                     "block_target": 8 * _MIB, "npar": 1}
    return _HW_CACHE


# ---------------------------------------------------------------------------
# Layout helpers
# ---------------------------------------------------------------------------
def _choose_lanes(numel):
    """Largest lane-dense width dividing numel (preferring >= 8 rows)."""
    first_div = None
    for lanes in LANE_CANDIDATES:
        if numel % lanes == 0:
            if first_div is None:
                first_div = lanes
            if numel // lanes >= 8:
                return lanes, numel
    if first_div is not None:
        return first_div, numel
    # Rare fallback (numel % 128 != 0): small jnp.pad copy is accepted here.
    padded = ((numel + 127) // 128) * 128
    return 128, padded


def _choose_tile_rows(n_rows, lanes, n_unit_streams, itemsize, block_target, vmem_limit):
    """Rows per block: ~block_target bytes per stream, capped so the
    double-buffered DMA working set stays well inside the scoped VMEM limit."""
    target = max(8, block_target // (lanes * itemsize))
    cap = max(8, int(0.4 * vmem_limit) // (2 * n_unit_streams * lanes * max(itemsize, 4)))
    t = min(target, cap)
    t = (t // 16) * 16 if t >= 16 else 8
    if n_rows <= 8:
        return n_rows
    return min(n_rows, t)


def _lane_dense_2d(x, lanes, padded_numel):
    """Flatten to 1-D (free for contiguous arrays) and view as (rows, lanes)."""
    flat = x.reshape(-1)
    if padded_numel != flat.shape[0]:
        flat = jnp.pad(flat, (0, padded_numel - flat.shape[0]))
    return flat.reshape(padded_numel // lanes, lanes)


# ---------------------------------------------------------------------------
# Kernel helpers / factories
# ---------------------------------------------------------------------------
def _accumulate(acc_ref, val, lanes):
    """Add a (rows, lanes) partial into an (8, lanes) accumulator with VPU adds."""
    r = val.shape[0]
    if r % 8 == 0:
        acc_ref[...] += val.reshape(r // 8, 8, lanes).sum(axis=0)
    else:  # tiny-tensor fallback (rows not a multiple of 8)
        acc_ref[0:1, :] += jnp.sum(val, axis=0, keepdims=True)


def _make_none_kernel(loss_weight, weighted):
    lw = float(loss_weight)

    def kernel(*refs):
        if weighted:
            p_ref, t_ref, w_ref, o_ref = refs
        else:
            p_ref, t_ref, o_ref = refs
        d = p_ref[...].astype(jnp.float32) - t_ref[...].astype(jnp.float32)
        val = d * d
        if weighted:
            val = val * w_ref[...].astype(jnp.float32)
        if lw != 1.0:
            val = val * jnp.float32(lw)           # fold loss_weight into the store
        o_ref[...] = val.astype(o_ref.dtype)

    return kernel


def _make_sum_kernel(rows, row_tile, lanes, steps, full_blocks, need_mask, weighted):
    def kernel(*refs):
        if weighted:
            p_ref, t_ref, w_ref, ls_ref, ws_ref = refs
        else:
            p_ref, t_ref, ls_ref = refs
        p_id = pl.program_id(0)
        i_id = pl.program_id(1)

        @pl.when(i_id == 0)
        def _():
            ls_ref[...] = jnp.zeros_like(ls_ref)
            if weighted:
                ws_ref[...] = jnp.zeros_like(ws_ref)

        d = p_ref[...].astype(jnp.float32) - t_ref[...].astype(jnp.float32)
        sq = d * d
        if weighted:
            w = w_ref[...].astype(jnp.float32)
            wsq = w * sq

        def _acc_unmasked():
            if weighted:
                _accumulate(ls_ref, wsq, lanes)
                _accumulate(ws_ref, w, lanes)
            else:
                _accumulate(ls_ref, sq, lanes)

        if not need_mask:
            # Common case: every block is fully valid -> no mask work at all.
            _acc_unmasked()
        else:
            blk = p_id * steps + i_id

            @pl.when(blk < full_blocks)           # steady state: mask-free
            def _():
                _acc_unmasked()

            @pl.when(blk >= full_blocks)          # ragged tail / duplicated block
            def _():
                row_start = blk * row_tile
                rr = lax.broadcasted_iota(jnp.int32, (row_tile, 1), 0)
                valid = (row_start + rr) < rows
                if weighted:
                    _accumulate(ls_ref, jnp.where(valid, wsq, 0.0), lanes)
                    _accumulate(ws_ref, jnp.where(valid, w, 0.0), lanes)
                else:
                    _accumulate(ls_ref, jnp.where(valid, sq, 0.0), lanes)

    return kernel


def _make_bcast_sum_kernel(hw_rows, hw_tile, lanes, full_blocks, need_mask):
    """Reduction kernel for single-channel weight; pred/target block carries all
    C channels so the small weight block is fetched once per (n, hw) tile."""

    def kernel(p_ref, t_ref, w_ref, ls_ref):
        b_id = pl.program_id(0)
        i_id = pl.program_id(1)

        @pl.when(jnp.logical_and(b_id == 0, i_id == 0))
        def _():
            ls_ref[...] = jnp.zeros_like(ls_ref)

        d = p_ref[0].astype(jnp.float32) - t_ref[0].astype(jnp.float32)  # (C, hw_tile, lanes)
        sq_c = jnp.sum(d * d, axis=0)                                    # (hw_tile, lanes)
        w = w_ref[0].astype(jnp.float32)                                 # (hw_tile, lanes)
        val = w * sq_c

        if not need_mask:
            _accumulate(ls_ref, val, lanes)
        else:
            @pl.when(i_id < full_blocks)
            def _():
                _accumulate(ls_ref, val, lanes)

            @pl.when(i_id >= full_blocks)
            def _():
                rr = lax.broadcasted_iota(jnp.int32, (hw_tile, 1), 0)
                valid = (i_id * hw_tile + rr) < hw_rows
                _accumulate(ls_ref, jnp.where(valid, val, 0.0), lanes)

    return kernel


# ---------------------------------------------------------------------------
# Single-channel weight reduction path (no broadcast materialization)
# ---------------------------------------------------------------------------
def _bcast_weight_loss_sum(pred, target, weight, block_target, vmem_limit):
    n, c, h, w_dim = pred.shape
    hw = h * w_dim
    lanes, _ = _choose_lanes(hw)            # hw % 128 == 0 guaranteed by caller
    hw_rows = hw // lanes
    itemsize = max(pred.dtype.itemsize, target.dtype.itemsize, weight.dtype.itemsize)
    # 2*C pred/target slabs + 1 weight slab move per grid step.
    hw_tile = _choose_tile_rows(hw_rows, lanes, 2 * c + 1, itemsize,
                                block_target, vmem_limit)
    hw_blocks = pl.cdiv(hw_rows, hw_tile)
    full_blocks = hw_rows // hw_tile
    need_mask = (hw_blocks != full_blocks)

    p4 = pred.reshape(n, c, hw_rows, lanes)
    t4 = target.reshape(n, c, hw_rows, lanes)
    w3 = weight.reshape(n, hw_rows, lanes)

    kern = _make_bcast_sum_kernel(hw_rows, hw_tile, lanes, full_blocks, need_mask)
    pt_spec = pl.BlockSpec((1, c, hw_tile, lanes), lambda b, i: (b, 0, i, 0))
    w_spec = pl.BlockSpec((1, hw_tile, lanes), lambda b, i: (b, i, 0))
    acc_spec = pl.BlockSpec((8, lanes), lambda b, i: (0, 0))

    ls = pl.pallas_call(
        kern,
        out_shape=jax.ShapeDtypeStruct((8, lanes), jnp.float32),
        grid=(n, hw_blocks),
        in_specs=[pt_spec, pt_spec, w_spec],
        out_specs=acc_spec,
        compiler_params=pltpu.CompilerParams(
            dimension_semantics=("arbitrary", "arbitrary"),
            vmem_limit_bytes=vmem_limit),
    )(p4, t4, w3)
    return jnp.sum(ls)


# ---------------------------------------------------------------------------
# Wrapper (forward pass of basicsr MSELoss)
# ---------------------------------------------------------------------------
def mse_loss_pallas(pred, target, weight=None, *, loss_weight=1.0, reduction="mean",
                    _lanes=None, _row_tile=None, _npar=None):
    if reduction not in ("none", "mean", "sum"):
        raise ValueError(f"Unsupported reduction mode: {reduction}")
    assert pred.shape == target.shape and pred.ndim == 4
    n, c, h, w_dim = pred.shape
    numel = n * c * h * w_dim

    hw_p = _hw_params()
    vmem_limit = hw_p["vmem_limit"]
    block_target = hw_p["block_target"]

    out_dtype = jnp.promote_types(pred.dtype, target.dtype)
    if weight is not None:
        out_dtype = jnp.promote_types(out_dtype, weight.dtype)

    # ---- single-channel weight on the reduction path: stream it directly ----
    if (weight is not None and weight.shape != pred.shape
            and reduction in ("mean", "sum")
            and weight.shape == (n, 1, h, w_dim)
            and (h * w_dim) % 128 == 0
            and _lanes is None and _row_tile is None):
        loss_sum = _bcast_weight_loss_sum(pred, target, weight, block_target, vmem_limit)
        if reduction == "sum":
            result = loss_sum
        else:
            # basicsr: single-channel weight normalizes by weight.sum() * C.
            result = loss_sum / (jnp.sum(weight.astype(jnp.float32)) * jnp.float32(c))
        return (jnp.float32(loss_weight) * result).astype(out_dtype)

    if weight is not None and weight.shape != pred.shape:
        # Fallback ('none' path or awkward spatial size): materialize the broadcast.
        # TODO(synk): stream the small weight directly on the 'none' path as well.
        weight = jnp.broadcast_to(weight, pred.shape)
    weighted = weight is not None

    if _lanes is not None:
        lanes = int(_lanes)
        padded_numel = ((numel + lanes - 1) // lanes) * lanes
    else:
        lanes, padded_numel = _choose_lanes(numel)
    rows = padded_numel // lanes
    itemsize = max(pred.dtype.itemsize, target.dtype.itemsize,
                   weight.dtype.itemsize if weighted else 1)

    p2 = _lane_dense_2d(pred, lanes, padded_numel)
    t2 = _lane_dense_2d(target, lanes, padded_numel)
    w2 = _lane_dense_2d(weight, lanes, padded_numel) if weighted else None

    # ---------------------------------------------------------------- 'none'
    if reduction == "none":
        n_streams = 4 if weighted else 3       # inputs + output
        row_tile = _row_tile or _choose_tile_rows(rows, lanes, n_streams, itemsize,
                                                  block_target, vmem_limit)
        total_blocks = pl.cdiv(rows, row_tile)
        tile_spec = pl.BlockSpec((row_tile, lanes), lambda i: (i, 0))
        kern = _make_none_kernel(loss_weight, weighted)
        in_arrays = (p2, t2, w2) if weighted else (p2, t2)
        out2 = pl.pallas_call(
            kern,
            out_shape=jax.ShapeDtypeStruct((rows, lanes), out_dtype),
            grid=(total_blocks,),
            in_specs=[tile_spec] * len(in_arrays),
            out_specs=tile_spec,
            compiler_params=pltpu.CompilerParams(
                dimension_semantics=("parallel",),
                vmem_limit_bytes=vmem_limit),
        )(*in_arrays)
        flat = out2.reshape(-1)
        if padded_numel != numel:
            flat = flat[:numel]
        return flat.reshape(n, c, h, w_dim)

    # ---------------------------------------------------------- 'mean'/'sum'
    n_streams = 3 if weighted else 2
    row_tile = _row_tile or _choose_tile_rows(rows, lanes, n_streams, itemsize,
                                              block_target, vmem_limit)
    total_blocks = pl.cdiv(rows, row_tile)
    npar = _npar if _npar is not None else hw_p["npar"]
    npar = npar if total_blocks >= npar else 1
    steps = pl.cdiv(total_blocks, npar)
    full_blocks = rows // row_tile             # blocks fully inside `rows`
    need_mask = (npar * steps) != full_blocks
    clamp = (npar * steps) != total_blocks     # duplicated tail slots exist

    if clamp:
        in_map = lambda p, i: (jnp.minimum(p * steps + i, total_blocks - 1), 0)
    else:
        in_map = lambda p, i: (p * steps + i, 0)
    in_spec = pl.BlockSpec((row_tile, lanes), in_map)
    acc_spec = pl.BlockSpec((8, lanes), lambda p, i: (p, 0))
    cparams = pltpu.CompilerParams(
        dimension_semantics=("parallel", "arbitrary"),
        vmem_limit_bytes=vmem_limit)
    # TODO(synk): consider pipeline_mode=pl.Buffered(3) on v7x if profiling shows exposed DMA.

    kern = _make_sum_kernel(rows, row_tile, lanes, steps, full_blocks, need_mask, weighted)
    if weighted:
        ls, ws = pl.pallas_call(
            kern,
            out_shape=(jax.ShapeDtypeStruct((npar * 8, lanes), jnp.float32),
                       jax.ShapeDtypeStruct((npar * 8, lanes), jnp.float32)),
            grid=(npar, steps),
            in_specs=[in_spec, in_spec, in_spec],
            out_specs=(acc_spec, acc_spec),
            compiler_params=cparams,
        )(p2, t2, w2)
        loss_sum = jnp.sum(ls)
        weight_sum = jnp.sum(ws)
    else:
        ls = pl.pallas_call(
            kern,
            out_shape=jax.ShapeDtypeStruct((npar * 8, lanes), jnp.float32),
            grid=(npar, steps),
            in_specs=[in_spec, in_spec],
            out_specs=acc_spec,
            compiler_params=cparams,
        )(p2, t2)
        loss_sum = jnp.sum(ls)

    if reduction == "sum":
        result = loss_sum
    else:  # 'mean'
        result = loss_sum / (weight_sum if weighted else jnp.float32(numel))
    return (jnp.float32(loss_weight) * result).astype(out_dtype)


# ---------------------------------------------------------------------------
# Demo / smoke test
# ---------------------------------------------------------------------------
if __name__ == "__main__":
    key = jax.random.PRNGKey(0)
    k1, k2, k3, k4, k5, k6, k7 = jax.random.split(key, 7)

    LW = 0.5
    N, C, H, W = 2, 4, 16, 16
    pred = jax.random.normal(k1, (N, C, H, W), dtype=jnp.float32)
    target = jax.random.normal(k2, (N, C, H, W), dtype=jnp.float32)
    weight = jax.random.uniform(k3, (N, C, H, W), dtype=jnp.float32)
    weight_bc = jax.random.uniform(k4, (N, 1, H, W), dtype=jnp.float32)
    sq = (pred - target) ** 2

    # 1) reduction='mean', no weight (default forward)
    out = jax.block_until_ready(
        mse_loss_pallas(pred, target, None, loss_weight=LW, reduction="mean"))
    assert jnp.allclose(out, LW * jnp.mean(sq), rtol=1e-5, atol=1e-6)

    # 2) reduction='sum', no weight
    out = jax.block_until_ready(
        mse_loss_pallas(pred, target, None, loss_weight=LW, reduction="sum"))
    assert jnp.allclose(out, LW * jnp.sum(sq), rtol=1e-5, atol=1e-4)

    # 3) reduction='none', weighted (loss_weight folded in-kernel)
    out = jax.block_until_ready(
        mse_loss_pallas(pred, target, weight, loss_weight=LW, reduction="none"))
    assert out.shape == (N, C, H, W)
    assert jnp.allclose(out, LW * weight * sq, rtol=1e-5, atol=1e-6)

    # 4) reduction='mean', full-shape weight -> normalize by weight.sum()
    out = jax.block_until_ready(
        mse_loss_pallas(pred, target, weight, loss_weight=LW, reduction="mean"))
    assert jnp.allclose(out, LW * jnp.sum(weight * sq) / jnp.sum(weight),
                        rtol=1e-5, atol=1e-6)

    # 5) reduction='mean', single-channel weight (no-broadcast kernel path)
    out = jax.block_until_ready(
        mse_loss_pallas(pred, target, weight_bc, loss_weight=LW, reduction="mean"))
    ref = LW * jnp.sum(weight_bc * sq) / (jnp.sum(weight_bc) * C)
    assert jnp.allclose(out, ref, rtol=1e-5, atol=1e-6)

    # 6) single-channel weight, larger spatial (channel-folded path, >= 8 rows)
    N2, C2, H2, W2 = 2, 3, 32, 32
    p2_ = jax.random.normal(k5, (N2, C2, H2, W2), dtype=jnp.float32)
    t2_ = jax.random.normal(k6, (N2, C2, H2, W2), dtype=jnp.float32)
    wbc2 = jax.random.uniform(k7, (N2, 1, H2, W2), dtype=jnp.float32)
    sq2 = (p2_ - t2_) ** 2
    out = jax.block_until_ready(
        mse_loss_pallas(p2_, t2_, wbc2, loss_weight=LW, reduction="sum"))
    assert jnp.allclose(out, LW * jnp.sum(wbc2 * sq2), rtol=1e-5, atol=1e-4)

    # 7) ragged tail exercised via forced small tiles (rows=12, row_tile=8)
    p3_ = p2_[:, :, :16, :16]
    t3_ = t2_[:, :, :16, :16]
    sq3 = (p3_ - t3_) ** 2
    out = jax.block_until_ready(
        mse_loss_pallas(p3_, t3_, None, loss_weight=LW, reduction="mean",
                        _lanes=128, _row_tile=8))
    assert jnp.allclose(out, LW * jnp.mean(sq3), rtol=1e-5, atol=1e-6)

    # 8) duplicated tail block via forced 2-way partition split (3 blocks / 2 parts)
    out = jax.block_until_ready(
        mse_loss_pallas(p2_, t2_, None, loss_weight=LW, reduction="sum",
                        _lanes=128, _row_tile=16, _npar=2))
    assert jnp.allclose(out, LW * jnp.sum(sq2), rtol=1e-5, atol=1e-4)

    print("KERNEL_OK")
</pallas_src>

<mosaic_0001>
module attributes {stable_mosaic.version = 11 : i64} {
  func.func @kernel(%arg0: i32, %arg1: i32, %arg2: memref<8x256xf32, #tpu.memory_space<vmem>>, %arg3: memref<8x256xf32, #tpu.memory_space<vmem>>, %arg4: memref<8x256xf32, #tpu.memory_space<vmem>>) attributes {dimension_semantics = [#tpu.dimension_semantics<parallel>, #tpu.dimension_semantics<arbitrary>], iteration_bounds = array<i64: 1, 1>, scalar_prefetch = 0 : i64, scratch_operands = 0 : i64, tpu.core_type = #tpu.core_type<tc>, window_params = [{transform_indices = @transform_0, window_bounds = array<i64: 8, 256>}, {transform_indices = @transform_1, window_bounds = array<i64: 8, 256>}, {transform_indices = @transform_2, window_bounds = array<i64: 8, 256>}]} {
    %c0_i32 = arith.constant 0 : i32
    %0 = arith.cmpi eq, %arg1, %c0_i32 : i32
    %1 = arith.extui %0 : i1 to i32
    %c0_i32_0 = arith.constant 0 : i32
    %2 = arith.cmpi ne, %1, %c0_i32_0 : i32
    scf.if %2 {
      %cst_8 = arith.constant 0.000000e+00 : f32
      %12 = vector.broadcast %cst_8 : f32 to vector<8x256xf32>
      %c0_9 = arith.constant 0 : index
      %c0_10 = arith.constant 0 : index
      %13 = vector.load %arg4[%c0_9, %c0_10] : memref<8x256xf32, #tpu.memory_space<vmem>>, vector<8x256xf32>
      tpu.vector_store %arg4[%c0_9, %c0_10], %12 {strides = array<i32>} : memref<8x256xf32, #tpu.memory_space<vmem>>, vector<8x256xf32>,
    } else {
    }
    %c0 = arith.constant 0 : index
    %c0_1 = arith.constant 0 : index
    %3 = vector.load %arg2[%c0, %c0_1] : memref<8x256xf32, #tpu.memory_space<vmem>>, vector<8x256xf32>
    %c0_2 = arith.constant 0 : index
    %c0_3 = arith.constant 0 : index
    %4 = vector.load %arg3[%c0_2, %c0_3] : memref<8x256xf32, #tpu.memory_space<vmem>>, vector<8x256xf32>
    %5 = arith.subf %3, %4 : vector<8x256xf32>
    %6 = arith.mulf %5, %5 : vector<8x256xf32>
    %c0_4 = arith.constant 0 : index
    %c0_5 = arith.constant 0 : index
    %7 = vector.load %arg4[%c0_4, %c0_5] : memref<8x256xf32, #tpu.memory_space<vmem>>, vector<8x256xf32>
    %8 = vector.shape_cast %6 : vector<8x256xf32> to vector<1x8x256xf32>
    %cst = arith.constant dense<0.000000e+00> : vector<8x256xf32>
    %9 = vector.multi_reduction <add>, %8, %cst [0] : vector<1x8x256xf32> to vector<8x256xf32>
    %10 = arith.addf %7, %9 : vector<8x256xf32>
    %c0_6 = arith.constant 0 : index
    %c0_7 = arith.constant 0 : index
    %11 = vector.load %arg4[%c0_6, %c0_7] : memref<8x256xf32, #tpu.memory_space<vmem>>, vector<8x256xf32>
    tpu.vector_store %arg4[%c0_6, %c0_7], %10 {strides = array<i32>} : memref<8x256xf32, #tpu.memory_space<vmem>>, vector<8x256xf32>,
    return
  }
  func.func @transform_0(%arg0: i32, %arg1: i32) -> (i32, i32) {
    %c1_i32 = arith.constant 1 : i32
    %0 = arith.muli %arg0, %c1_i32 : i32
    %1 = arith.addi %0, %arg1 : i32
    %c0_i32 = arith.constant 0 : i32
    %c0_i32_0 = arith.constant 0 : i32
    return %1, %c0_i32 : i32, i32
  }
  func.func @transform_1(%arg0: i32, %arg1: i32) -> (i32, i32) {
    %c1_i32 = arith.constant 1 : i32
    %0 = arith.muli %arg0, %c1_i32 : i32
    %1 = arith.addi %0, %arg1 : i32
    %c0_i32 = arith.constant 0 : i32
    %c0_i32_0 = arith.constant 0 : i32
    return %1, %c0_i32 : i32, i32
  }
  func.func @transform_2(%arg0: i32, %arg1: i32) -> (i32, i32) {
    %c0_i32 = arith.constant 0 : i32
    %c0_i32_0 = arith.constant 0 : i32
    return %arg0, %c0_i32 : i32, i32
  }
}

</mosaic_0001>

<llo_original>
// kernel: tpu_custom_call.1
$region0: #{tpu_custom_call.1}
  #allocation0 [shape = 'u32[]', space=smem, size = 0x4, offset = 0x4, fixed_abs, tag = 'smem constant byte address 0x4 - core index']
  #allocation1 [shape = 'u32[144,128]{1,0:T(1,128)}', space=vmem, size = 0x12000, scoped, tag = 'internal scratch']
  %s0 = inlined_call_operand.hbm [shape: f32[8,256], index: 0, kind: input, shape index: {}]
  %s1 = inlined_call_operand.hbm [shape: f32[8,256], index: 1, kind: input, shape index: {}]
  %s2 = inlined_call_operand.hbm [shape: f32[8,256], index: 2, kind: output, shape index: {}]
  %s3 = sld [smem:[#allocation0]]
  $region30: #{tpu_custom_call.1} parent=0
    _
  %s5 = ssub.s32 1, %s3
  %s6 = scalar_select 0, %s5, %s3
  $region1: #{tpu_custom_call.1} parent=0
    #allocation2 [shape = 'u8[8192]{0}', space=vmem, size = 0x2000, scoped, tag = 'input window, operand 0, single buffered']
    #allocation3 [shape = 's32[1]{0}', space=sflag, size = 0x4, scoped, tag = 'scoped memory for tpu_custom_call.1']
    #allocation4 [shape = 's32[1]{0}', space=sflag, size = 0x4, scoped, tag = 'scoped memory for tpu_custom_call.1']
    #allocation5 [shape = 'u8[8192]{0}', space=vmem, size = 0x2000, scoped, tag = 'input window, operand 1, single buffered']
    #allocation6 [shape = 's32[1]{0}', space=sflag, size = 0x4, scoped, tag = 'scoped memory for tpu_custom_call.1']
    #allocation7 [shape = 'u8[8192]{0}', space=vmem, size = 0x2000, scoped, tag = 'output window, operand 0, single buffered']
    %7 = vsyncpa [#allocation3], 0
    %8 = vsyncpa [#allocation6], 0
    %9 = vsyncpa [#allocation4], 0
    // Predicated region
    $region2: #{tpu_custom_call.1} parent=1 // pred_check
      _
    $region3: #{tpu_custom_call.1} parent=1 // pred_check_branch
      %11 = sbr.rel (0) target = $region5
    $region4: #{tpu_custom_call.1} parent=1 // pred_region
      %s12 = sadd.s32 0, 0
      %s14 = ssub.s32 256, 256
      %15 = vsyncadd [#allocation3], %s14
      %s16 = smul.addr %s12, 2
      %s17 = smul.addr %s16, 128
      %s18 = scalar_lea.hbm %s0, %s17
      %s20 = sshll.u32 [#allocation2], 4
      %s21 = int_to_ptr.vmem [resolvable:$true] %s20
      %23 = dma.hbm_to_vmem [thread:$0]  %s18, 256, %s21, [#allocation3]
    $region5: #{tpu_custom_call.1} parent=1 // pred_fallthru
      _
    // Predicated region
    $region6: #{tpu_custom_call.1} parent=1 // pred_check
      _
    $region7: #{tpu_custom_call.1} parent=1 // pred_check_branch
      %25 = sbr.rel (0) target = $region9
    $region8: #{tpu_custom_call.1} parent=1 // pred_region
      %s26 = sadd.s32 0, 0
      %s28 = ssub.s32 256, 256
      %29 = vsyncadd [#allocation6], %s28
      %s30 = smul.addr %s26, 2
      %s31 = smul.addr %s30, 128
      %s32 = scalar_lea.hbm %s1, %s31
      %s34 = sshll.u32 [#allocation5], 4
      %s35 = int_to_ptr.vmem [resolvable:$true] %s34
      %37 = dma.hbm_to_vmem [thread:$0]  %s32, 256, %s35, [#allocation6]
    $region9: #{tpu_custom_call.1} parent=1 // pred_fallthru
      _
    // Predicated region
    $region10: #{tpu_custom_call.1} parent=1 // pred_check
      _
    $region11: #{tpu_custom_call.1} parent=1 // pred_check_branch
      %39 = sbr.rel (0) target = $region13
    $region12: #{tpu_custom_call.1} parent=1 // pred_region
      %40 = dma.done [#allocation3], 256
    $region13: #{tpu_custom_call.1} parent=1 // pred_fallthru
      _
    // Predicated region
    $region14: #{tpu_custom_call.1} parent=1 // pred_check
      _
    $region15: #{tpu_custom_call.1} parent=1 // pred_check_branch
      %42 = sbr.rel (0) target = $region17
    $region16: #{tpu_custom_call.1} parent=1 // pred_region
      %43 = dma.done [#allocation6], 256
    $region17: #{tpu_custom_call.1} parent=1 // pred_fallthru
      _
    %s44 = sadd.s32 0, 0
    %s45 = sadd.s32 0, 0
    %p46 = scmp.eq.s32.totalorder 0, 0
    // Predicated region
    $region18: #{tpu_custom_call.1} parent=1 // pred_check
      %p47 = pneg %p46
    $region19: #{tpu_custom_call.1} parent=1 // pred_check_branch
      %49 = sbr.rel (%p47) target = $region21
    $region20: #{tpu_custom_call.1} parent=1 // pred_region
      %50 = vst [vmem:[#allocation7] sm:$0xff] 0.0
      %51 = vst [vmem:[#allocation7 + $0x8] sm:$0xff] 0.0
    $region21: #{tpu_custom_call.1} parent=1 // pred_fallthru
      _
    %v52 = vld [vmem:[#allocation2] sm:$0xff]
    %v53 = vld [vmem:[#allocation2 + $0x8] sm:$0xff]
    %v54 = vld [vmem:[#allocation5] sm:$0xff]
    %v55 = vld [vmem:[#allocation5 + $0x8] sm:$0xff]
    %v56 = vsub.f32 %v52, %v54
    %v57 = vsub.f32 %v53, %v55
    %v58 = vmul.f32 %v56, %v56
    %v59 = vmul.f32 %v57, %v57
    %v60 = vld [vmem:[#allocation7] sm:$0xff]
    %v61 = vld [vmem:[#allocation7 + $0x8] sm:$0xff]
    %v62 = vadd.f32 %v58, 0.0
    %v63 = vadd.f32 %v59, 0.0
    %v64 = vadd.f32 %v60, %v62
    %v65 = vadd.f32 %v61, %v63
    %66 = vst [vmem:[#allocation7] sm:$0xff] %v64
    %67 = vst [vmem:[#allocation7 + $0x8] sm:$0xff] %v65
    // Predicated region
    $region22: #{tpu_custom_call.1} parent=1 // pred_check
      _
    $region23: #{tpu_custom_call.1} parent=1 // pred_check_branch
      %69 = sbr.rel (0) target = $region25
    $region24: #{tpu_custom_call.1} parent=1 // pred_region
      %s71 = ssub.s32 256, 256
      %72 = vsyncadd [#allocation4], %s71
      %s74 = sshll.u32 [#allocation7], 4
      %s75 = int_to_ptr.vmem [resolvable:$true] %s74
      %77 = dma.vmem_to_hbm [thread:$0]  %s75, 256, %s2, [#allocation4]
    $region25: #{tpu_custom_call.1} parent=1 // pred_fallthru
      _
    // Predicated region
    $region26: #{tpu_custom_call.1} parent=1 // pred_check
      _
    $region27: #{tpu_custom_call.1} parent=1 // pred_check_branch
      %79 = sbr.rel (0) target = $region29
    $region28: #{tpu_custom_call.1} parent=1 // pred_region
      %80 = dma.done [#allocation4], 256
    $region29: #{tpu_custom_call.1} parent=1 // pred_fallthru
      _
    %81 = vsyncpa [#allocation3], 1
    %82 = vsyncpa [#allocation6], 1
    %83 = vsyncpa [#allocation4], 1

</llo_original>
